<compile_context>
chip_gen: v7x
topology: tpu7x:2x2x1
jax: 0.10.0
libtpu: 0.0.40
codegen_flags: <defaults>
</compile_context>

<pallas_src>
import jax
import jax.numpy as jnp
from jax.experimental import pallas as pl
from jax.experimental.pallas import tpu as pltpu

EPS = 1e-5


def _round_up_128(d):
    return max(128, ((d + 127) // 128) * 128)


def global_embedding_kernel(x_ref, w1_ref, bn1_ref, w2_ref, o_ref):
    n = x_ref.shape[0]
    inv_n = 1.0 / n

    # ---- Linear 1 (MXU).  Bias dropped: cancelled by BN1 mean subtraction. ----
    h = jnp.dot(x_ref[...], w1_ref[...], preferred_element_type=jnp.float32)

    # ---- BatchNorm1d(hidden) with batch statistics, fused single-pass stats ----
    s1 = jnp.sum(h, axis=0, keepdims=True)
    ss1 = jnp.sum(h * h, axis=0, keepdims=True)
    mean1 = s1 * inv_n
    var1 = jnp.maximum(ss1 * inv_n - mean1 * mean1, 0.0)  # biased variance, clamped

    g1 = bn1_ref[0:1, :]   # gamma  (row 0 of packed slab)
    be1 = bn1_ref[1:2, :]  # beta   (row 1 of packed slab)
    scale1 = jax.lax.rsqrt(var1 + EPS) * g1        # fold 1xD factors once
    shift1 = be1 - mean1 * scale1                  # fold mean into the shift
    # BN1 + ReLU in one lane-dense VPU pass.  Padded hidden columns stay exactly 0.
    h = jnp.maximum(h * scale1 + shift1, 0.0)

    # ---- Linear 2 (MXU).  Bias dropped: cancelled by BN2 mean subtraction. ----
    y = jnp.dot(h, w2_ref[...], preferred_element_type=jnp.float32)

    # ---- BatchNorm1d(output, affine=False), batch statistics ----
    s2 = jnp.sum(y, axis=0, keepdims=True)
    ss2 = jnp.sum(y * y, axis=0, keepdims=True)
    mean2 = s2 * inv_n
    var2 = jnp.maximum(ss2 * inv_n - mean2 * mean2, 0.0)
    scale2 = jax.lax.rsqrt(var2 + EPS)
    shift2 = -mean2 * scale2
    o_ref[...] = y * scale2 + shift2               # lane-dense full-width store


def prepare_global_embedding_params(w1, b1, g1, be1, w2, b2):
    """One-time packing/padding of parameters (NOT on the per-call hot path).

    Weights are stored [in, out] (transposed vs. PyTorch).  b1 / b2 are accepted
    for API parity but dropped: each bias is exactly removed by the subsequent
    BatchNorm's batch-mean subtraction.  All padding is strictly zero so padded
    hidden/output features normalize to exactly 0 and contribute nothing.
    """
    del b1, b2  # mathematically dead under batch-stat BatchNorm

    d_in, d_hid = w1.shape
    d_out = w2.shape[1]
    d_hid_pad = _round_up_128(d_hid)
    d_out_pad = _round_up_128(d_out)

    w1p = jnp.pad(w1.astype(jnp.float32), ((0, 0), (0, d_hid_pad - d_hid)))
    bn1 = jnp.concatenate(
        [g1.reshape(1, d_hid), be1.reshape(1, d_hid)], axis=0
    ).astype(jnp.float32)
    bn1 = jnp.pad(bn1, ((0, 0), (0, d_hid_pad - d_hid)))        # padded gamma/beta = 0
    w2p = jnp.pad(w2.astype(jnp.float32),
                  ((0, d_hid_pad - d_hid), (0, d_out_pad - d_out)))

    return {"w1": w1p, "bn1": bn1, "w2": w2p, "d_out": d_out, "d_out_pad": d_out_pad}


def global_embedding(x, params):
    """x: [N, D_in] f32; params from prepare_global_embedding_params.

    Returns the padded (N, d_out_pad) result; columns >= params['d_out'] are
    exactly 0.  Consumers slice once if they need the tight shape (kept off the
    hot path here on purpose).
    """
    w1p, bn1, w2p = params["w1"], params["bn1"], params["w2"]
    n, d_in = x.shape
    d_hid_pad = w1p.shape[1]
    d_out_pad = w2p.shape[1]

    vmem_spec = pl.BlockSpec(memory_space=pltpu.MemorySpace.VMEM)

    flops = (2 * n * d_in * d_hid_pad + 2 * n * d_hid_pad * d_out_pad
             + 8 * n * (d_hid_pad + d_out_pad))
    transcendentals = d_hid_pad + d_out_pad
    bytes_accessed = 4 * (x.size + w1p.size + bn1.size + w2p.size + n * d_out_pad)

    return pl.pallas_call(
        global_embedding_kernel,
        out_shape=jax.ShapeDtypeStruct((n, d_out_pad), jnp.float32),
        in_specs=[vmem_spec, vmem_spec, vmem_spec, vmem_spec],
        out_specs=vmem_spec,
        cost_estimate=pl.CostEstimate(
            flops=flops,
            transcendentals=transcendentals,
            bytes_accessed=bytes_accessed,
        ),
        # 32 MiB only does real work on v5e (default scoped limit 16 MiB there);
        # restates the default on v6e/v7x.  Fully-resident design is fine at
        # these shapes; see TODO(synk) above for large-N batch tiling.
        compiler_params=pltpu.CompilerParams(vmem_limit_bytes=32 * 1024 * 1024),
    )(x, w1p, bn1, w2p)


def reference(x, w1, b1, g1, be1, w2, b2):
    """Pure-JAX reference with biases kept (verifies they indeed cancel)."""
    h = x @ w1 + b1
    m = h.mean(0, keepdims=True)
    v = ((h - m) ** 2).mean(0, keepdims=True)
    h = (h - m) / jnp.sqrt(v + EPS) * g1 + be1
    h = jnp.maximum(h, 0.0)
    y = h @ w2 + b2
    m2 = y.mean(0, keepdims=True)
    v2 = ((y - m2) ** 2).mean(0, keepdims=True)
    return (y - m2) / jnp.sqrt(v2 + EPS)


if __name__ == "__main__":
    # Small shapes consistent with the module (input_dim -> hidden_dim -> output_dim).
    N, D_IN, D_HID, D_OUT = 8, 32, 64, 16

    key = jax.random.PRNGKey(0)
    kx, kw1, kb1, kw2, kb2 = jax.random.split(key, 5)

    x = jax.random.normal(kx, (N, D_IN), dtype=jnp.float32)

    # PyTorch-Linear-style uniform init bounds.
    bound1 = 1.0 / jnp.sqrt(D_IN)
    w1 = jax.random.uniform(kw1, (D_IN, D_HID), jnp.float32, -bound1, bound1)
    b1 = jax.random.uniform(kb1, (1, D_HID), jnp.float32, -bound1, bound1)
    # BatchNorm1d(hidden_dim) affine params: gamma=1, beta=0 (PyTorch default init).
    g1 = jnp.ones((1, D_HID), jnp.float32)
    be1 = jnp.zeros((1, D_HID), jnp.float32)

    bound2 = 1.0 / jnp.sqrt(D_HID)
    w2 = jax.random.uniform(kw2, (D_HID, D_OUT), jnp.float32, -bound2, bound2)
    b2 = jax.random.uniform(kb2, (1, D_OUT), jnp.float32, -bound2, bound2)
    # Final BatchNorm1d(output_dim, affine=False): no learnable params.

    # One-time parameter packing (off the per-call hot path).
    params = prepare_global_embedding_params(w1, b1, g1, be1, w2, b2)

    out_padded = global_embedding(x, params)
    out_padded = jax.block_until_ready(out_padded)

    ref = reference(x, w1, b1, g1, be1, w2, b2)

    assert out_padded.shape == (N, params["d_out_pad"])
    out = out_padded[:, :D_OUT]                       # consumer-side slice (test only)
    assert out.shape == (N, D_OUT)
    assert jnp.allclose(out, ref, atol=1e-4, rtol=1e-4), "mismatch vs. JAX reference"
    # Padded lanes must be exactly zero (strict-zero padding invariant).
    assert jnp.all(out_padded[:, D_OUT:] == 0.0), "padded output lanes not zero"

    print("KERNEL_OK")
</pallas_src>

<mosaic_0001>
module attributes {stable_mosaic.version = 11 : i64} {
  func.func @global_embedding_kernel(%arg0: memref<8x32xf32, #tpu.memory_space<vmem>>, %arg1: memref<32x128xf32, #tpu.memory_space<vmem>>, %arg2: memref<2x128xf32, #tpu.memory_space<vmem>>, %arg3: memref<128x128xf32, #tpu.memory_space<vmem>>, %arg4: memref<8x128xf32, #tpu.memory_space<vmem>>) attributes {dimension_semantics = [], scalar_prefetch = 0 : i64, scratch_operands = 0 : i64, tpu.core_type = #tpu.core_type<tc>} {
    %c0 = arith.constant 0 : index
    %c0_0 = arith.constant 0 : index
    %0 = vector.load %arg0[%c0, %c0_0] : memref<8x32xf32, #tpu.memory_space<vmem>>, vector<8x32xf32>
    %c0_1 = arith.constant 0 : index
    %c0_2 = arith.constant 0 : index
    %1 = vector.load %arg1[%c0_1, %c0_2] : memref<32x128xf32, #tpu.memory_space<vmem>>, vector<32x128xf32>
    %cst = arith.constant dense<0.000000e+00> : vector<8x128xf32>
    %2 = tpu.matmul %0, %1, %cst {dimension_numbers = #tpu.dot_dimension_numbers<[1], [0], [0], [1], [0, 0, 1, 1], [], []>} : vector<8x32xf32>, vector<32x128xf32>, vector<8x128xf32> -> vector<8x128xf32>
    %cst_3 = arith.constant dense<0.000000e+00> : vector<128xf32>
    %3 = vector.multi_reduction <add>, %2, %cst_3 [0] : vector<8x128xf32> to vector<128xf32>
    %4 = vector.shape_cast %3 : vector<128xf32> to vector<1x128xf32>
    %5 = arith.mulf %2, %2 : vector<8x128xf32>
    %cst_4 = arith.constant dense<0.000000e+00> : vector<128xf32>
    %6 = vector.multi_reduction <add>, %5, %cst_4 [0] : vector<8x128xf32> to vector<128xf32>
    %7 = vector.shape_cast %6 : vector<128xf32> to vector<1x128xf32>
    %cst_5 = arith.constant 1.250000e-01 : f32
    %8 = vector.broadcast %cst_5 : f32 to vector<1x128xf32>
    %9 = arith.mulf %4, %8 : vector<1x128xf32>
    %cst_6 = arith.constant 1.250000e-01 : f32
    %10 = vector.broadcast %cst_6 : f32 to vector<1x128xf32>
    %11 = arith.mulf %7, %10 : vector<1x128xf32>
    %12 = arith.mulf %9, %9 : vector<1x128xf32>
    %13 = arith.subf %11, %12 : vector<1x128xf32>
    %cst_7 = arith.constant 0.000000e+00 : f32
    %14 = vector.broadcast %cst_7 : f32 to vector<1x128xf32>
    %15 = arith.maximumf %13, %14 : vector<1x128xf32>
    %c0_8 = arith.constant 0 : index
    %c0_9 = arith.constant 0 : index
    %16 = vector.load %arg2[%c0_8, %c0_9] : memref<2x128xf32, #tpu.memory_space<vmem>>, vector<1x128xf32>
    %c1 = arith.constant 1 : index
    %c0_10 = arith.constant 0 : index
    %17 = vector.load %arg2[%c1, %c0_10] : memref<2x128xf32, #tpu.memory_space<vmem>>, vector<1x128xf32>
    %cst_11 = arith.constant 9.99999974E-6 : f32
    %18 = vector.broadcast %cst_11 : f32 to vector<1x128xf32>
    %19 = arith.addf %15, %18 : vector<1x128xf32>
    %20 = math.rsqrt %19 : vector<1x128xf32>
    %21 = arith.mulf %20, %16 : vector<1x128xf32>
    %22 = arith.mulf %9, %21 : vector<1x128xf32>
    %23 = arith.subf %17, %22 : vector<1x128xf32>
    %24 = vector.broadcast %21 : vector<1x128xf32> to vector<8x128xf32>
    %25 = arith.mulf %2, %24 : vector<8x128xf32>
    %26 = vector.broadcast %23 : vector<1x128xf32> to vector<8x128xf32>
    %27 = arith.addf %25, %26 : vector<8x128xf32>
    %cst_12 = arith.constant 0.000000e+00 : f32
    %28 = vector.broadcast %cst_12 : f32 to vector<8x128xf32>
    %29 = arith.maximumf %27, %28 : vector<8x128xf32>
    %c0_13 = arith.constant 0 : index
    %c0_14 = arith.constant 0 : index
    %30 = vector.load %arg3[%c0_13, %c0_14] : memref<128x128xf32, #tpu.memory_space<vmem>>, vector<128x128xf32>
    %cst_15 = arith.constant dense<0.000000e+00> : vector<8x128xf32>
    %31 = tpu.matmul %29, %30, %cst_15 {dimension_numbers = #tpu.dot_dimension_numbers<[1], [0], [0], [1], [0, 0, 1, 1], [], []>} : vector<8x128xf32>, vector<128x128xf32>, vector<8x128xf32> -> vector<8x128xf32>
    %cst_16 = arith.constant dense<0.000000e+00> : vector<128xf32>
    %32 = vector.multi_reduction <add>, %31, %cst_16 [0] : vector<8x128xf32> to vector<128xf32>
    %33 = vector.shape_cast %32 : vector<128xf32> to vector<1x128xf32>
    %34 = arith.mulf %31, %31 : vector<8x128xf32>
    %cst_17 = arith.constant dense<0.000000e+00> : vector<128xf32>
    %35 = vector.multi_reduction <add>, %34, %cst_17 [0] : vector<8x128xf32> to vector<128xf32>
    %36 = vector.shape_cast %35 : vector<128xf32> to vector<1x128xf32>
    %cst_18 = arith.constant 1.250000e-01 : f32
    %37 = vector.broadcast %cst_18 : f32 to vector<1x128xf32>
    %38 = arith.mulf %33, %37 : vector<1x128xf32>
    %cst_19 = arith.constant 1.250000e-01 : f32
    %39 = vector.broadcast %cst_19 : f32 to vector<1x128xf32>
    %40 = arith.mulf %36, %39 : vector<1x128xf32>
    %41 = arith.mulf %38, %38 : vector<1x128xf32>
    %42 = arith.subf %40, %41 : vector<1x128xf32>
    %cst_20 = arith.constant 0.000000e+00 : f32
    %43 = vector.broadcast %cst_20 : f32 to vector<1x128xf32>
    %44 = arith.maximumf %42, %43 : vector<1x128xf32>
    %cst_21 = arith.constant 9.99999974E-6 : f32
    %45 = vector.broadcast %cst_21 : f32 to vector<1x128xf32>
    %46 = arith.addf %44, %45 : vector<1x128xf32>
    %47 = math.rsqrt %46 : vector<1x128xf32>
    %cst_22 = arith.constant 0.000000e+00 : f32
    %48 = vector.broadcast %cst_22 : f32 to vector<1x128xf32>
    %49 = arith.subf %48, %38 : vector<1x128xf32>
    %50 = arith.mulf %49, %47 : vector<1x128xf32>
    %51 = vector.broadcast %47 : vector<1x128xf32> to vector<8x128xf32>
    %52 = arith.mulf %31, %51 : vector<8x128xf32>
    %53 = vector.broadcast %50 : vector<1x128xf32> to vector<8x128xf32>
    %54 = arith.addf %52, %53 : vector<8x128xf32>
    %c0_23 = arith.constant 0 : index
    %c0_24 = arith.constant 0 : index
    %55 = vector.load %arg4[%c0_23, %c0_24] : memref<8x128xf32, #tpu.memory_space<vmem>>, vector<8x128xf32>
    tpu.vector_store %arg4[%c0_23, %c0_24], %54 {strides = array<i32>} : memref<8x128xf32, #tpu.memory_space<vmem>>, vector<8x128xf32>,
    return
  }
}

</mosaic_0001>

<llo_original>
// kernel: tpu_custom_call.1
$region0: #{tpu_custom_call.1}
  #allocation0 [shape = 'u32[]', space=smem, size = 0x4, offset = 0x4, fixed_abs, tag = 'smem constant byte address 0x4 - core index']
  #allocation1 [shape = 'u32[144,128]{1,0:T(1,128)}', space=vmem, size = 0x12000, scoped, tag = 'internal scratch']
  %s0 = inlined_call_operand.hbm [shape: f32[8,32], index: 0, kind: input, shape index: {}]
  %s1 = inlined_call_operand.hbm [shape: f32[32,128], index: 1, kind: input, shape index: {}]
  %s2 = inlined_call_operand.vmem [shape: f32[2,128], index: 2, kind: input, shape index: {}]
  %s3 = inlined_call_operand.hbm [shape: f32[128,128], index: 3, kind: input, shape index: {}]
  %s4 = inlined_call_operand.hbm [shape: f32[8,128], index: 4, kind: output, shape index: {}]
  %s5 = sld [smem:[#allocation0]]
  $region38: #{tpu_custom_call.1} parent=0
    _
  %s7 = ssub.s32 1, %s5
  %s8 = scalar_select 0, %s7, %s5
  $region1: #{tpu_custom_call.1} parent=0
    #allocation2 [shape = 'u8[4096]{0}', space=vmem, size = 0x1000, scoped, tag = 'input window, operand 0, single buffered']
    #allocation3 [shape = 's32[1]{0}', space=sflag, size = 0x4, scoped, tag = 'scoped memory for tpu_custom_call.1']
    #allocation4 [shape = 's32[1]{0}', space=sflag, size = 0x4, scoped, tag = 'scoped memory for tpu_custom_call.1']
    #allocation5 [shape = 'u8[16384]{0}', space=vmem, size = 0x4000, scoped, tag = 'input window, operand 1, single buffered']
    #allocation6 [shape = 's32[1]{0}', space=sflag, size = 0x4, scoped, tag = 'scoped memory for tpu_custom_call.1']
    #allocation7 [shape = 'u8[65536]{0}', space=vmem, size = 0x10000, scoped, tag = 'input window, operand 3, single buffered']
    #allocation8 [shape = 'u8[4096]{0}', space=vmem, size = 0x1000, scoped, tag = 'output window, operand 0, single buffered']
    %9 = vsyncpa [#allocation3], 0
    %10 = vsyncpa [#allocation6], 0
    %11 = vsyncpa [#allocation4], 0
    // Predicated region
    $region2: #{tpu_custom_call.1} parent=1 // pred_check
      _
    $region3: #{tpu_custom_call.1} parent=1 // pred_check_branch
      %13 = sbr.rel (0) target = $region5
    $region4: #{tpu_custom_call.1} parent=1 // pred_region
      %s15 = ssub.s32 128, 128
      %16 = vsyncadd [#allocation3], %s15
      %s18 = sshll.u32 [#allocation2], 4
      %s19 = int_to_ptr.vmem [resolvable:$true] %s18
      %21 = dma.hbm_to_vmem [thread:$0]  %s0, 128, %s19, [#allocation3]
    $region5: #{tpu_custom_call.1} parent=1 // pred_fallthru
      _
    // Predicated region
    $region6: #{tpu_custom_call.1} parent=1 // pred_check
      _
    $region7: #{tpu_custom_call.1} parent=1 // pred_check_branch
      %23 = sbr.rel (0) target = $region9
    $region8: #{tpu_custom_call.1} parent=1 // pred_region
      %s25 = ssub.s32 512, 512
      %26 = vsyncadd [#allocation6], %s25
      %s27 = sshll.u32 [#allocation5], 4
      %s28 = int_to_ptr.vmem [resolvable:$true] %s27
      %33 = dma.hbm_to_vmem [thread:$0]  %s1, 512, %s28, [#allocation6], 128, 128, 8
    $region9: #{tpu_custom_call.1} parent=1 // pred_fallthru
      _
    // Predicated region
    $region10: #{tpu_custom_call.1} parent=1 // pred_check
      _
    $region11: #{tpu_custom_call.1} parent=1 // pred_check_branch
      %35 = sbr.rel (0) target = $region13
    $region12: #{tpu_custom_call.1} parent=1 // pred_region
      _
    $region13: #{tpu_custom_call.1} parent=1 // pred_fallthru
      _
    // Predicated region
    $region14: #{tpu_custom_call.1} parent=1 // pred_check
      _
    $region15: #{tpu_custom_call.1} parent=1 // pred_check_branch
      %37 = sbr.rel (0) target = $region17
    $region16: #{tpu_custom_call.1} parent=1 // pred_region
      %s39 = ssub.s32 2048, 2048
      %40 = vsyncadd [#allocation6], %s39
      %s41 = sshll.u32 [#allocation7], 4
      %s42 = int_to_ptr.vmem [resolvable:$true] %s41
      %47 = dma.hbm_to_vmem [thread:$0]  %s3, 2048, %s42, [#allocation6], 128, 128, 8
    $region17: #{tpu_custom_call.1} parent=1 // pred_fallthru
      _
    // Predicated region
    $region18: #{tpu_custom_call.1} parent=1 // pred_check
      _
    $region19: #{tpu_custom_call.1} parent=1 // pred_check_branch
      %49 = sbr.rel (0) target = $region21
    $region20: #{tpu_custom_call.1} parent=1 // pred_region
      %50 = dma.done [#allocation3], 128
    $region21: #{tpu_custom_call.1} parent=1 // pred_fallthru
      _
    // Predicated region
    $region22: #{tpu_custom_call.1} parent=1 // pred_check
      _
    $region23: #{tpu_custom_call.1} parent=1 // pred_check_branch
      %52 = sbr.rel (0) target = $region25
    $region24: #{tpu_custom_call.1} parent=1 // pred_region
      %53 = dma.done [#allocation6], 512
    $region25: #{tpu_custom_call.1} parent=1 // pred_fallthru
      _
    // Predicated region
    $region26: #{tpu_custom_call.1} parent=1 // pred_check
      _
    $region27: #{tpu_custom_call.1} parent=1 // pred_check_branch
      %55 = sbr.rel (0) target = $region29
    $region28: #{tpu_custom_call.1} parent=1 // pred_region
      %56 = dma.done [#allocation6], 2048
    $region29: #{tpu_custom_call.1} parent=1 // pred_fallthru
      _
    %v57 = vld [vmem:[#allocation2] sm:$0xff]
    %v58 = vld [vmem:[#allocation5] sm:$0xff]
    %v59 = vld [vmem:[#allocation5 + $0x8] sm:$0xff]
    %v60 = vld [vmem:[#allocation5 + $0x10] sm:$0xff]
    %v61 = vld [vmem:[#allocation5 + $0x18] sm:$0xff]
    %vm62 = vcmask 261120
    %v64 = vsel %vm62, %v57, 0
    %66 = vmatprep.subr.mxu0 0.0
    %67 = vmatpush1.msra.mxu0 %v58
    %68 = vmatprep.subr.mxu0 0.0
    %69 = vmatpush1.msra.mxu0 %v59
    %70 = vmatprep.subr.mxu0 0.0
    %71 = vmatpush1.msra.mxu0 %v60
    %72 = vmatprep.subr.mxu0 0.0
    %73 = vmatpush1.msra.mxu0 %v61
    %74 = vmatprep.subr.mxu0 0.0
    %75 = vmatpush1.msra.mxu0 0.0
    %76 = vmatprep.subr.mxu0 0.0
    %77 = vmatpush1.msra.mxu0 0.0
    %78 = vmatprep.subr.mxu0 0.0
    %79 = vmatpush1.msra.mxu0 0.0
    %80 = vmatprep.subr.mxu0 0.0
    %81 = vmatpush1.msra.mxu0 0.0
    %82 = vmatprep.subr.mxu0 0.0
    %83 = vmatpush1.msra.mxu0 0.0
    %84 = vmatprep.subr.mxu0 0.0
    %85 = vmatpush1.msra.mxu0 0.0
    %86 = vmatprep.subr.mxu0 0.0
    %87 = vmatpush1.msra.mxu0 0.0
    %88 = vmatprep.subr.mxu0 0.0
    %89 = vmatpush1.msra.mxu0 0.0
    %90 = vmatprep.subr.mxu0 0.0
    %91 = vmatpush1.msra.mxu0 0.0
    %92 = vmatprep.subr.mxu0 0.0
    %93 = vmatpush1.msra.mxu0 0.0
    %94 = vmatprep.subr.mxu0 0.0
    %95 = vmatpush1.msra.mxu0 0.0
    %96 = vmatprep.subr.mxu0 0.0
    %97 = vmatpush1.msra.mxu0 0.0
    %98 = vmatprep.subr.mxu0 0.0
    %99 = vmatpush1.msra.mxu0 0.0
    %100 = vmatprep.subr.mxu0 0.0
    %101 = vmatpush1.msra.mxu0 0.0
    %102 = vmatprep.subr.mxu0 0.0
    %103 = vmatpush1.msra.mxu0 0.0
    %104 = vmatprep.subr.mxu0 0.0
    %105 = vmatpush1.msra.mxu0 0.0
    %106 = vmatprep.subr.mxu0 0.0
    %107 = vmatpush1.msra.mxu0 0.0
    %108 = vmatprep.subr.mxu0 0.0
    %109 = vmatpush1.msra.mxu0 0.0
    %110 = vmatprep.subr.mxu0 0.0
    %111 = vmatpush1.msra.mxu0 0.0
    %112 = vmatprep.subr.mxu0 0.0
    %113 = vmatpush1.msra.mxu0 0.0
    %114 = vmatprep.subr.mxu0 0.0
    %115 = vmatpush1.msra.mxu0 0.0
    %116 = vmatprep.subr.mxu0 0.0
    %117 = vmatpush1.msra.mxu0 0.0
    %118 = vmatprep.subr.mxu0 0.0
    %119 = vmatpush1.msra.mxu0 0.0
    %120 = vmatprep.subr.mxu0 0.0
    %121 = vmatpush1.msra.mxu0 0.0
    %122 = vmatprep.subr.mxu0 0.0
    %123 = vmatpush1.msra.mxu0 0.0
    %124 = vmatprep.subr.mxu0 0.0
    %125 = vmatpush1.msra.mxu0 0.0
    %126 = vmatprep.subr.mxu0 0.0
    %127 = vmatpush1.msra.mxu0 0.0
    %128 = vmatprep.subr.mxu0 0.0
    %129 = vmatpush1.msra.mxu0 0.0
    %130 = vmatprep.mubr.f32.mxu0 0.0
    %131 = vmatmul.mubr.f32.gmra.mrb[0].mxu0 %v64
    %v132 = vpop.f32.mrb[0].mxu0
    %v133 = vadd.f32 0.0, %v132
    %v134 = vpop.f32.mrb[0].mxu0
    %135 = vdwg.mxu0
    %v136 = vrot.slane %v133, 4
    %v137 = vadd.f32 %v133, %v136
    %v138 = vrot.slane %v137, 2
    %v139 = vadd.f32 %v137, %v138
    %v140 = vrot.slane %v139, 1
    %v141 = vadd.f32 %v139, %v140
    %v142 = vmul.f32 %v133, %v133
    %v143 = vrot.slane %v142, 4
    %v144 = vadd.f32 %v142, %v143
    %v145 = vrot.slane %v144, 2
    %v146 = vadd.f32 %v144, %v145
    %v147 = vrot.slane %v146, 1
    %v148 = vadd.f32 %v146, %v147
    %v149 = vmul.f32 %v141, 0.125
    %v150 = vmul.f32 %v148, 0.125
    %v151 = vmul.f32 %v149, %v149
    %v152 = vsub.f32 %v150, %v151
    %v153 = vmax.f32 %v152, 0.0
    %v154 = vld [vmem:[%s2] sm:$0x1]
    %v155 = vld [vmem:[%s2 + $0x1] sm:$0x1]
    %v156 = vadd.f32 %v153, 1e-05
    %v157 = vrsqrt.pop %v156
    %v158 = vmul.f32 %v157, %v154
    %v159 = vmul.f32 %v149, %v158
    %v160 = vsub.f32 %v155, %v159
    %v161 = vlaneseq
    %v162 = vshrl.u32 %v161, 7
    %v163 = vsub.s32 0, %v162
    %v164 = vrot.slane %v158, %v163
    %v165 = vmul.f32 %v133, %v164
    %v166 = vlaneseq
    %v167 = vshrl.u32 %v166, 7
    %v168 = vsub.s32 0, %v167
    %v169 = vrot.slane %v160, %v168
    %v170 = vadd.f32 %v165, %v169
    %v171 = vmax.f32 %v170, 0.0
    %v172 = vld [vmem:[#allocation7] sm:$0xff]
    %v173 = vld [vmem:[#allocation7 + $0x8] sm:$0xff]
    %v174 = vld [vmem:[#allocation7 + $0x10] sm:$0xff]
    %v175 = vld [vmem:[#allocation7 + $0x18] sm:$0xff]
    %v176 = vld [vmem:[#allocation7 + $0x20] sm:$0xff]
    %v177 = vld [vmem:[#allocation7 + $0x28] sm:$0xff]
    %v178 = vld [vmem:[#allocation7 + $0x30] sm:$0xff]
    %v179 = vld [vmem:[#allocation7 + $0x38] sm:$0xff]
    %v180 = vld [vmem:[#allocation7 + $0x40] sm:$0xff]
    %v181 = vld [vmem:[#allocation7 + $0x48] sm:$0xff]
    %v182 = vld [vmem:[#allocation7 + $0x50] sm:$0xff]
    %v183 = vld [vmem:[#allocation7 + $0x58] sm:$0xff]
    %v184 = vld [vmem:[#allocation7 + $0x60] sm:$0xff]
    %v185 = vld [vmem:[#allocation7 + $0x68] sm:$0xff]
    %v186 = vld [vmem:[#allocation7 + $0x70] sm:$0xff]
    %v187 = vld [vmem:[#allocation7 + $0x78] sm:$0xff]
    %188 = vmatprep.subr.mxu0 0.0
    %189 = vmatpush1.msra.mxu0 %v172
    %190 = vmatprep.subr.mxu0 0.0
    %191 = vmatpush1.msra.mxu0 %v173
    %192 = vmatprep.subr.mxu0 0.0
    %193 = vmatpush1.msra.mxu0 %v174
    %194 = vmatprep.subr.mxu0 0.0
    %195 = vmatpush1.msra.mxu0 %v175
    %196 = vmatprep.subr.mxu0 0.0
    %197 = vmatpush1.msra.mxu0 %v176
    %198 = vmatprep.subr.mxu0 0.0
    %199 = vmatpush1.msra.mxu0 %v177
    %200 = vmatprep.subr.mxu0 0.0
    %201 = vmatpush1.msra.mxu0 %v178
    %202 = vmatprep.subr.mxu0 0.0
    %203 = vmatpush1.msra.mxu0 %v179
    %204 = vmatprep.subr.mxu0 0.0
    %205 = vmatpush1.msra.mxu0 %v180
    %206 = vmatprep.subr.mxu0 0.0
    %207 = vmatpush1.msra.mxu0 %v181
    %208 = vmatprep.subr.mxu0 0.0
    %209 = vmatpush1.msra.mxu0 %v182
    %210 = vmatprep.subr.mxu0 0.0
    %211 = vmatpush1.msra.mxu0 %v183
    %212 = vmatprep.subr.mxu0 0.0
    %213 = vmatpush1.msra.mxu0 %v184
    %214 = vmatprep.subr.mxu0 0.0
    %215 = vmatpush1.msra.mxu0 %v185
    %216 = vmatprep.subr.mxu0 0.0
    %217 = vmatpush1.msra.mxu0 %v186
    %218 = vmatprep.subr.mxu0 0.0
    %219 = vmatpush1.msra.mxu0 %v187
    %220 = vmatprep.subr.mxu0 0.0
    %221 = vmatpush1.msra.mxu0 0.0
    %222 = vmatprep.subr.mxu0 0.0
    %223 = vmatpush1.msra.mxu0 0.0
    %224 = vmatprep.subr.mxu0 0.0
    %225 = vmatpush1.msra.mxu0 0.0
    %226 = vmatprep.subr.mxu0 0.0
    %227 = vmatpush1.msra.mxu0 0.0
    %228 = vmatprep.subr.mxu0 0.0
    %229 = vmatpush1.msra.mxu0 0.0
    %230 = vmatprep.subr.mxu0 0.0
    %231 = vmatpush1.msra.mxu0 0.0
    %232 = vmatprep.subr.mxu0 0.0
    %233 = vmatpush1.msra.mxu0 0.0
    %234 = vmatprep.subr.mxu0 0.0
    %235 = vmatpush1.msra.mxu0 0.0
    %236 = vmatprep.subr.mxu0 0.0
    %237 = vmatpush1.msra.mxu0 0.0
    %238 = vmatprep.subr.mxu0 0.0
    %239 = vmatpush1.msra.mxu0 0.0
    %240 = vmatprep.subr.mxu0 0.0
    %241 = vmatpush1.msra.mxu0 0.0
    %242 = vmatprep.subr.mxu0 0.0
    %243 = vmatpush1.msra.mxu0 0.0
    %244 = vmatprep.subr.mxu0 0.0
    %245 = vmatpush1.msra.mxu0 0.0
    %246 = vmatprep.subr.mxu0 0.0
    %247 = vmatpush1.msra.mxu0 0.0
    %248 = vmatprep.subr.mxu0 0.0
    %249 = vmatpush1.msra.mxu0 0.0
    %250 = vmatprep.subr.mxu0 0.0
    %251 = vmatpush1.msra.mxu0 0.0
    %252 = vmatprep.mubr.f32.mxu0 0.0
    %253 = vmatmul.mubr.f32.gmra.mrb[0].mxu0 %v171
    %v254 = vpop.f32.mrb[0].mxu0
    %v255 = vadd.f32 0.0, %v254
    %v256 = vpop.f32.mrb[0].mxu0
    %257 = vdwg.mxu0
    %v258 = vrot.slane %v255, 4
    %v259 = vadd.f32 %v255, %v258
    %v260 = vrot.slane %v259, 2
    %v261 = vadd.f32 %v259, %v260
    %v262 = vrot.slane %v261, 1
    %v263 = vadd.f32 %v261, %v262
    %v264 = vmul.f32 %v255, %v255
    %v265 = vrot.slane %v264, 4
    %v266 = vadd.f32 %v264, %v265
    %v267 = vrot.slane %v266, 2
    %v268 = vadd.f32 %v266, %v267
    %v269 = vrot.slane %v268, 1
    %v270 = vadd.f32 %v268, %v269
    %v271 = vmul.f32 %v263, 0.125
    %v272 = vmul.f32 %v270, 0.125
    %v273 = vmul.f32 %v271, %v271
    %v274 = vsub.f32 %v272, %v273
    %v275 = vmax.f32 %v274, 0.0
    %v276 = vadd.f32 %v275, 1e-05
    %v277 = vrsqrt.pop %v276
    %v278 = vsub.f32 0.0, %v271
    %v279 = vmul.f32 %v278, %v277
    %v280 = vmul.f32 %v255, %v277
    %v281 = vadd.f32 %v280, %v279
    %282 = vst [vmem:[#allocation8] sm:$0xff] %v281
    // Predicated region
    $region30: #{tpu_custom_call.1} parent=1 // pred_check
      _
    $region31: #{tpu_custom_call.1} parent=1 // pred_check_branch
      %284 = sbr.rel (0) target = $region33
    $region32: #{tpu_custom_call.1} parent=1 // pred_region
      %s286 = ssub.s32 128, 128
      %287 = vsyncadd [#allocation4], %s286
      %s289 = sshll.u32 [#allocation8], 4
      %s290 = int_to_ptr.vmem [resolvable:$true] %s289
      %292 = dma.vmem_to_hbm [thread:$0]  %s290, 128, %s4, [#allocation4]
    $region33: #{tpu_custom_call.1} parent=1 // pred_fallthru
      _
    // Predicated region
    $region34: #{tpu_custom_call.1} parent=1 // pred_check
      _
    $region35: #{tpu_custom_call.1} parent=1 // pred_check_branch
      %294 = sbr.rel (0) target = $region37
    $region36: #{tpu_custom_call.1} parent=1 // pred_region
      %295 = dma.done [#allocation4], 128
    $region37: #{tpu_custom_call.1} parent=1 // pred_fallthru
      _
    %296 = vsyncpa [#allocation3], 1
    %297 = vsyncpa [#allocation6], 1
    %298 = vsyncpa [#allocation4], 1

</llo_original>
